<compile_context>
chip_gen: v7x
topology: tpu7x:2x2x1
jax: 0.10.0
libtpu: 0.0.40
codegen_flags: <defaults>
</compile_context>

<pallas_src>
import functools
import math

import jax
import jax.numpy as jnp
from jax.experimental import pallas as pl
from jax.experimental.pallas import tpu as pltpu


# ----------------------------------------------------------------------------
# Kernels
# ----------------------------------------------------------------------------
def _dense_kernel_fullk(*refs, weight_gain, bias_gain, activation, has_bias):
    """Single-shot kernel: the whole K dimension lives in one block."""
    if has_bias:
        x_ref, w_ref, b_ref, o_ref = refs
    else:
        x_ref, w_ref, o_ref = refs
        b_ref = None

    # x tile: [tm, K], w tile (native [out, in] layout): [tn, K] -> [tm, tn]
    out = jax.lax.dot_general(
        x_ref[...], w_ref[...],
        dimension_numbers=(((1,), (1,)), ((), ())),
        preferred_element_type=jnp.float32)

    # g * (x @ W^T) == x @ (g*W)^T : fold the equalized-lr gain into f32 result.
    out = out * weight_gain
    if has_bias:
        b = b_ref[...].astype(jnp.float32)            # [1, tn]
        if bias_gain != 1.0:
            b = b * bias_gain
        out = out + b                                  # broadcast over rows
    if activation is not None:
        out = activation(out)
    o_ref[...] = out.astype(o_ref.dtype)


def _dense_kernel_ktiled(*refs, weight_gain, bias_gain, activation, has_bias,
                         acc_in_out, in_features, tk):
    """Fallback kernel for very large K: accumulate over a K grid axis."""
    if has_bias:
        if acc_in_out:
            x_ref, w_ref, b_ref, o_ref = refs
            acc_ref = o_ref                            # f32 output == accumulator
        else:
            x_ref, w_ref, b_ref, o_ref, acc_ref = refs
    else:
        if acc_in_out:
            x_ref, w_ref, o_ref = refs
            acc_ref = o_ref
            b_ref = None
        else:
            x_ref, w_ref, o_ref, acc_ref = refs
            b_ref = None

    k = pl.program_id(2)

    @pl.when(k == 0)
    def _():
        acc_ref[...] = jnp.zeros_like(acc_ref)

    x = x_ref[...]
    w = w_ref[...]
    if in_features % tk != 0:
        # K tail: the out-of-bounds part of the last K block holds undefined
        # VMEM; mask BOTH operands (guards against stale NaN/Inf bit patterns).
        valid = in_features - k * tk                   # >= tk except last block
        col_x = jax.lax.broadcasted_iota(jnp.int32, x.shape, dimension=1)
        x = jnp.where(col_x < valid, x, 0)
        col_w = jax.lax.broadcasted_iota(jnp.int32, w.shape, dimension=1)
        w = jnp.where(col_w < valid, w, 0)

    acc_ref[...] += jax.lax.dot_general(
        x, w,
        dimension_numbers=(((1,), (1,)), ((), ())),
        preferred_element_type=jnp.float32).astype(acc_ref.dtype)

    @pl.when(k == pl.num_programs(2) - 1)
    def _():
        out = acc_ref[...].astype(jnp.float32) * weight_gain
        if has_bias:
            b = b_ref[...].astype(jnp.float32)
            if bias_gain != 1.0:
                b = b * bias_gain
            out = out + b
        if activation is not None:
            out = activation(out)
        o_ref[...] = out.astype(o_ref.dtype)


# ----------------------------------------------------------------------------
# Wrapper
# ----------------------------------------------------------------------------
def dense_forward(x, weight, bias=None, *, lr_multi=1.0, activation=None,
                  vmem_budget_bytes=40 * 1024 * 1024):
    """Pallas implementation of Dense.forward.

    x:      [B, in_features]
    weight: [out_features, in_features]   (native PyTorch layout)
    bias:   [out_features] or None
    """
    B, K = x.shape
    N, Kw = weight.shape
    assert Kw == K, "weight/in_features mismatch"

    weight_gain = float(lr_multi) / math.sqrt(float(K))
    bias_gain = float(lr_multi)
    has_bias = bias is not None

    xb = x.dtype.itemsize
    wb = weight.dtype.itemsize
    out_dtype = x.dtype
    ob = out_dtype.itemsize

    # ---------------- tile selection -----------------------------------------
    # M tile: as tall as possible (hides the weight DMA), full B when small.
    tm = B if B <= 512 else 512

    # N tile: lane-dense (full dim or a multiple of 128).
    if N <= 256:
        tn = N
    else:
        tn = 512 if N >= 512 else 256
        if pl.cdiv(B, tm) == 1:
            # Only one M block: make sure there are >=2 N blocks so both
            # TensorCores on v7x get work (no cost on single-TC v5e/v6e).
            half = ((pl.cdiv(N, 2) + 127) // 128) * 128
            tn = min(tn, max(128, half))

    # K tile: full K whenever the double-buffered footprint fits the budget.
    def _footprint(tk_, with_scratch):
        f = 2 * (tm * tk_ * xb + tn * tk_ * wb) + 2 * tm * tn * ob
        if with_scratch:
            f += tm * tn * 4
        return f

    full_k = _footprint(K, False) <= vmem_budget_bytes
    acc_in_out = False
    needs_scratch = False
    tk = K
    if not full_k:
        acc_in_out = (out_dtype == jnp.float32)        # accumulate into o_ref
        needs_scratch = not acc_in_out
        tk = 2048
        while tk > 256 and _footprint(tk, needs_scratch) > vmem_budget_bytes:
            tk //= 2
        if tk >= K:                                    # degenerate: one K block
            full_k, tk, acc_in_out, needs_scratch = True, K, False, False

    fp = _footprint(tk, needs_scratch)
    vmem_limit = int(min(max(int(fp * 1.3) + (4 << 20), 16 << 20), 56 << 20))

    # ---------------- specs / grid --------------------------------------------
    inputs = [x, weight]
    if full_k:
        grid = (pl.cdiv(B, tm), pl.cdiv(N, tn))
        in_specs = [
            pl.BlockSpec((tm, K), lambda i, j: (i, 0)),     # x tile (full K)
            pl.BlockSpec((tn, K), lambda i, j: (j, 0)),     # weight, native [out,in]
        ]
        if has_bias:
            in_specs.append(pl.BlockSpec((1, tn), lambda i, j: (0, j)))
            inputs.append(bias.reshape(1, N))
        out_specs = pl.BlockSpec((tm, tn), lambda i, j: (i, j))
        scratch_shapes = []
        dims = ("parallel", "parallel")
        kernel = functools.partial(
            _dense_kernel_fullk, weight_gain=weight_gain, bias_gain=bias_gain,
            activation=activation, has_bias=has_bias)
    else:
        grid = (pl.cdiv(B, tm), pl.cdiv(N, tn), pl.cdiv(K, tk))
        in_specs = [
            pl.BlockSpec((tm, tk), lambda i, j, k: (i, k)),
            pl.BlockSpec((tn, tk), lambda i, j, k: (j, k)),
        ]
        if has_bias:
            in_specs.append(pl.BlockSpec((1, tn), lambda i, j, k: (0, j)))
            inputs.append(bias.reshape(1, N))
        out_specs = pl.BlockSpec((tm, tn), lambda i, j, k: (i, j))
        scratch_shapes = ([pltpu.VMEM((tm, tn), jnp.float32)]
                          if needs_scratch else [])
        dims = ("parallel", "parallel", "arbitrary")
        kernel = functools.partial(
            _dense_kernel_ktiled, weight_gain=weight_gain, bias_gain=bias_gain,
            activation=activation, has_bias=has_bias, acc_in_out=acc_in_out,
            in_features=K, tk=tk)

    cost = pl.CostEstimate(
        flops=2 * B * N * K,
        transcendentals=0,
        bytes_accessed=(B * K * xb + N * K * wb + B * N * ob
                        + (N * bias.dtype.itemsize if has_bias else 0)))

    return pl.pallas_call(
        kernel,
        out_shape=jax.ShapeDtypeStruct((B, N), out_dtype),
        grid_spec=pltpu.PrefetchScalarGridSpec(
            num_scalar_prefetch=0,
            grid=grid,
            in_specs=in_specs,
            out_specs=out_specs,
            scratch_shapes=scratch_shapes,
        ),
        compiler_params=pltpu.CompilerParams(
            dimension_semantics=dims,
            vmem_limit_bytes=vmem_limit),
        cost_estimate=cost,
    )(*inputs)


# ----------------------------------------------------------------------------
# Pure-JAX reference (mirrors the PyTorch module)
# ----------------------------------------------------------------------------
def dense_reference(x, weight, bias, *, lr_multi=1.0, activation=None):
    in_features = weight.shape[1]
    w = weight * (lr_multi / math.sqrt(float(in_features)))
    y = x @ w.T
    if bias is not None:
        y = y + bias * lr_multi
    if activation is not None:
        y = activation(y)
    return y


if __name__ == "__main__":
    key = jax.random.PRNGKey(0)
    k_x, k_w, k_x2, k_w2 = jax.random.split(key, 4)

    # ---- test 1: default full-K path, bias + activation ---------------------
    B, in_features, out_features = 8, 32, 64
    lr_multi = 2.0
    bias_init = 0.5

    # Parameter init matching the module: weight = randn([out,in]) / lr_multi,
    # bias = full([out], bias_init).
    x = jax.random.normal(k_x, (B, in_features), dtype=jnp.float32)
    weight = jax.random.normal(
        k_w, (out_features, in_features), dtype=jnp.float32) / lr_multi
    bias = jnp.full((out_features,), jnp.float32(bias_init))
    act = lambda v: jax.nn.leaky_relu(v, 0.2)

    out = jax.block_until_ready(
        dense_forward(x, weight, bias, lr_multi=lr_multi, activation=act))
    ref = dense_reference(x, weight, bias, lr_multi=lr_multi, activation=act)
    assert out.shape == (B, out_features)
    assert jnp.allclose(out, ref, atol=1e-5, rtol=1e-5), "mismatch (full-K)"

    # ---- test 2: no-bias / no-activation full-K path -------------------------
    out_nb = jax.block_until_ready(
        dense_forward(x, weight, None, lr_multi=lr_multi, activation=None))
    ref_nb = dense_reference(x, weight, None, lr_multi=lr_multi, activation=None)
    assert jnp.allclose(out_nb, ref_nb, atol=1e-5, rtol=1e-5), "mismatch (no bias)"

    # ---- test 3: force the K-tiled fallback (exercises K-tail masking and
    #      accumulate-into-o_ref) by shrinking the VMEM budget ----------------
    in2 = 384   # not a multiple of tk=256 -> tail masking active
    x2 = jax.random.normal(k_x2, (B, in2), dtype=jnp.float32)
    w2 = jax.random.normal(k_w2, (out_features, in2), dtype=jnp.float32) / lr_multi
    out_t = jax.block_until_ready(
        dense_forward(x2, w2, bias, lr_multi=lr_multi, activation=act,
                      vmem_budget_bytes=1))
    ref_t = dense_reference(x2, w2, bias, lr_multi=lr_multi, activation=act)
    assert jnp.allclose(out_t, ref_t, atol=1e-5, rtol=1e-5), "mismatch (K-tiled)"

    print("KERNEL_OK")
</pallas_src>

<mosaic_0001>
module attributes {stable_mosaic.version = 11 : i64} {
  func.func @_dense_kernel_fullk(%arg0: i32, %arg1: i32, %arg2: memref<8x32xf32, #tpu.memory_space<vmem>>, %arg3: memref<64x32xf32, #tpu.memory_space<vmem>>, %arg4: memref<1x64xf32, #tpu.memory_space<vmem>>, %arg5: memref<8x64xf32, #tpu.memory_space<vmem>>) attributes {dimension_semantics = [#tpu.dimension_semantics<parallel>, #tpu.dimension_semantics<parallel>], iteration_bounds = array<i64: 1, 1>, scalar_prefetch = 0 : i64, scratch_operands = 0 : i64, tpu.core_type = #tpu.core_type<tc>, window_params = [{transform_indices = @transform_0, window_bounds = array<i64: 8, 32>}, {transform_indices = @transform_1, window_bounds = array<i64: 64, 32>}, {transform_indices = @transform_2, window_bounds = array<i64: 1, 64>}, {transform_indices = @transform_3, window_bounds = array<i64: 8, 64>}]} {
    %c0 = arith.constant 0 : index
    %c0_0 = arith.constant 0 : index
    %0 = vector.load %arg2[%c0, %c0_0] : memref<8x32xf32, #tpu.memory_space<vmem>>, vector<8x32xf32>
    %c0_1 = arith.constant 0 : index
    %c0_2 = arith.constant 0 : index
    %1 = vector.load %arg3[%c0_1, %c0_2] : memref<64x32xf32, #tpu.memory_space<vmem>>, vector<64x32xf32>
    %cst = arith.constant dense<0.000000e+00> : vector<8x64xf32>
    %2 = tpu.matmul %0, %1, %cst {dimension_numbers = #tpu.dot_dimension_numbers<[1], [1], [0], [0], [0, 0, 1, 0], [], []>} : vector<8x32xf32>, vector<64x32xf32>, vector<8x64xf32> -> vector<8x64xf32>
    %cst_3 = arith.constant 0.353553385 : f32
    %3 = vector.broadcast %cst_3 : f32 to vector<8x64xf32>
    %4 = arith.mulf %2, %3 : vector<8x64xf32>
    %c0_4 = arith.constant 0 : index
    %c0_5 = arith.constant 0 : index
    %5 = vector.load %arg4[%c0_4, %c0_5] : memref<1x64xf32, #tpu.memory_space<vmem>>, vector<1x64xf32>
    %cst_6 = arith.constant 2.000000e+00 : f32
    %6 = vector.broadcast %cst_6 : f32 to vector<1x64xf32>
    %7 = arith.mulf %5, %6 : vector<1x64xf32>
    %8 = vector.broadcast %7 : vector<1x64xf32> to vector<8x64xf32>
    %9 = arith.addf %4, %8 : vector<8x64xf32>
    %cst_7 = arith.constant 2.000000e-01 : f32
    %cst_8 = arith.constant 0.000000e+00 : f32
    %10 = vector.broadcast %cst_8 : f32 to vector<8x64xf32>
    %11 = arith.cmpf oge, %9, %10 : vector<8x64xf32>
    %12 = vector.broadcast %cst_7 : f32 to vector<8x64xf32>
    %13 = arith.mulf %12, %9 : vector<8x64xf32>
    %14 = arith.select %11, %9, %13 : vector<8x64xi1>, vector<8x64xf32>
    %c0_9 = arith.constant 0 : index
    %c0_10 = arith.constant 0 : index
    %15 = vector.load %arg5[%c0_9, %c0_10] : memref<8x64xf32, #tpu.memory_space<vmem>>, vector<8x64xf32>
    tpu.vector_store %arg5[%c0_9, %c0_10], %14 {strides = array<i32>} : memref<8x64xf32, #tpu.memory_space<vmem>>, vector<8x64xf32>,
    return
  }
  func.func @transform_0(%arg0: i32, %arg1: i32) -> (i32, i32) {
    %c0_i32 = arith.constant 0 : i32
    %c0_i32_0 = arith.constant 0 : i32
    return %arg0, %c0_i32 : i32, i32
  }
  func.func @transform_1(%arg0: i32, %arg1: i32) -> (i32, i32) {
    %c0_i32 = arith.constant 0 : i32
    %c0_i32_0 = arith.constant 0 : i32
    return %arg1, %c0_i32 : i32, i32
  }
  func.func @transform_2(%arg0: i32, %arg1: i32) -> (i32, i32) {
    %c0_i32 = arith.constant 0 : i32
    %c0_i32_0 = arith.constant 0 : i32
    return %c0_i32, %arg1 : i32, i32
  }
  func.func @transform_3(%arg0: i32, %arg1: i32) -> (i32, i32) {
    %c0_i32 = arith.constant 0 : i32
    return %arg0, %arg1 : i32, i32
  }
}

</mosaic_0001>

<llo_original>
// kernel: tpu_custom_call.1
$region0: #{tpu_custom_call.1}
  #allocation0 [shape = 'u32[]', space=smem, size = 0x4, offset = 0x4, fixed_abs, tag = 'smem constant byte address 0x4 - core index']
  #allocation1 [shape = 'u32[144,128]{1,0:T(1,128)}', space=vmem, size = 0x12000, scoped, tag = 'internal scratch']
  %s0 = inlined_call_operand.vmem [shape: f32[8,32], index: 0, kind: input, shape index: {}]
  %s1 = inlined_call_operand.vmem [shape: f32[64,32], index: 1, kind: input, shape index: {}]
  %s2 = inlined_call_operand.vmem [shape: f32[1,64], index: 2, kind: input, shape index: {}]
  %s3 = inlined_call_operand.hbm [shape: f32[8,64], index: 3, kind: output, shape index: {}]
  %s4 = sld [smem:[#allocation0]]
  $region22: #{tpu_custom_call.1} parent=0
    _
  %s6 = ssub.s32 1, %s4
  %s7 = scalar_select 0, %s6, %s4
  $region1: #{tpu_custom_call.1} parent=0
    #allocation2 [shape = 'u8[4096]{0}', space=vmem, size = 0x1000, scoped, tag = 'output window, operand 0, single buffered']
    #allocation3 [shape = 's32[1]{0}', space=sflag, size = 0x4, scoped, tag = 'scoped memory for tpu_custom_call.1']
    %8 = vsyncpa [#allocation3], 0
    // Predicated region
    $region2: #{tpu_custom_call.1} parent=1 // pred_check
      _
    $region3: #{tpu_custom_call.1} parent=1 // pred_check_branch
      %10 = sbr.rel (0) target = $region5
    $region4: #{tpu_custom_call.1} parent=1 // pred_region
      _
    $region5: #{tpu_custom_call.1} parent=1 // pred_fallthru
      _
    // Predicated region
    $region6: #{tpu_custom_call.1} parent=1 // pred_check
      _
    $region7: #{tpu_custom_call.1} parent=1 // pred_check_branch
      %12 = sbr.rel (0) target = $region9
    $region8: #{tpu_custom_call.1} parent=1 // pred_region
      _
    $region9: #{tpu_custom_call.1} parent=1 // pred_fallthru
      _
    // Predicated region
    $region10: #{tpu_custom_call.1} parent=1 // pred_check
      _
    $region11: #{tpu_custom_call.1} parent=1 // pred_check_branch
      %14 = sbr.rel (0) target = $region13
    $region12: #{tpu_custom_call.1} parent=1 // pred_region
      _
    $region13: #{tpu_custom_call.1} parent=1 // pred_fallthru
      _
    %v15 = vld [vmem:[%s0] sm:$0xff]
    %v16 = vld [vmem:[%s1] sm:$0xff]
    %v17 = vld [vmem:[%s1 + $0x8] sm:$0xff]
    %v18 = vld [vmem:[%s1 + $0x10] sm:$0xff]
    %v19 = vld [vmem:[%s1 + $0x18] sm:$0xff]
    %v20 = vld [vmem:[%s1 + $0x20] sm:$0xff]
    %v21 = vld [vmem:[%s1 + $0x28] sm:$0xff]
    %v22 = vld [vmem:[%s1 + $0x30] sm:$0xff]
    %v23 = vld [vmem:[%s1 + $0x38] sm:$0xff]
    %vm24 = vcmask 261120
    %v26 = vsel %vm24, %v15, 0
    %v29 = vsel %vm24, %v16, 0
    %v32 = vsel %vm24, %v17, 0
    %v35 = vsel %vm24, %v18, 0
    %v38 = vsel %vm24, %v19, 0
    %v41 = vsel %vm24, %v20, 0
    %v44 = vsel %vm24, %v21, 0
    %v47 = vsel %vm24, %v22, 0
    %v50 = vsel %vm24, %v23, 0
    %52 = vmatprep.subr.mxu0 0.0
    %53 = vmatpush1.xpose.msra.mxu0 %v29
    %54 = vmatprep.subr.mxu0 0.0
    %55 = vmatpush1.xpose.msra.mxu0 %v32
    %56 = vmatprep.subr.mxu0 0.0
    %57 = vmatpush1.xpose.msra.mxu0 %v35
    %58 = vmatprep.subr.mxu0 0.0
    %59 = vmatpush1.xpose.msra.mxu0 %v38
    %60 = vmatprep.subr.mxu0 0.0
    %61 = vmatpush1.xpose.msra.mxu0 %v41
    %62 = vmatprep.subr.mxu0 0.0
    %63 = vmatpush1.xpose.msra.mxu0 %v44
    %64 = vmatprep.subr.mxu0 0.0
    %65 = vmatpush1.xpose.msra.mxu0 %v47
    %66 = vmatprep.subr.mxu0 0.0
    %67 = vmatpush1.xpose.msra.mxu0 %v50
    %68 = vmatprep.subr.mxu0 0.0
    %69 = vmatpush1.xpose.msra.mxu0 0.0
    %70 = vmatprep.subr.mxu0 0.0
    %71 = vmatpush1.xpose.msra.mxu0 0.0
    %72 = vmatprep.subr.mxu0 0.0
    %73 = vmatpush1.xpose.msra.mxu0 0.0
    %74 = vmatprep.subr.mxu0 0.0
    %75 = vmatpush1.xpose.msra.mxu0 0.0
    %76 = vmatprep.subr.mxu0 0.0
    %77 = vmatpush1.xpose.msra.mxu0 0.0
    %78 = vmatprep.subr.mxu0 0.0
    %79 = vmatpush1.xpose.msra.mxu0 0.0
    %80 = vmatprep.subr.mxu0 0.0
    %81 = vmatpush1.xpose.msra.mxu0 0.0
    %82 = vmatprep.subr.mxu0 0.0
    %83 = vmatpush1.xpose.msra.mxu0 0.0
    %84 = vmatprep.subr.mxu0 0.0
    %85 = vmatpush1.xpose.msra.mxu0 0.0
    %86 = vmatprep.subr.mxu0 0.0
    %87 = vmatpush1.xpose.msra.mxu0 0.0
    %88 = vmatprep.subr.mxu0 0.0
    %89 = vmatpush1.xpose.msra.mxu0 0.0
    %90 = vmatprep.subr.mxu0 0.0
    %91 = vmatpush1.xpose.msra.mxu0 0.0
    %92 = vmatprep.subr.mxu0 0.0
    %93 = vmatpush1.xpose.msra.mxu0 0.0
    %94 = vmatprep.subr.mxu0 0.0
    %95 = vmatpush1.xpose.msra.mxu0 0.0
    %96 = vmatprep.subr.mxu0 0.0
    %97 = vmatpush1.xpose.msra.mxu0 0.0
    %98 = vmatprep.subr.mxu0 0.0
    %99 = vmatpush1.xpose.msra.mxu0 0.0
    %100 = vmatprep.subr.mxu0 0.0
    %101 = vmatpush1.xpose.msra.mxu0 0.0
    %102 = vmatprep.subr.mxu0 0.0
    %103 = vmatpush1.xpose.msra.mxu0 0.0
    %104 = vmatprep.subr.mxu0 0.0
    %105 = vmatpush1.xpose.msra.mxu0 0.0
    %106 = vmatprep.subr.mxu0 0.0
    %107 = vmatpush1.xpose.msra.mxu0 0.0
    %108 = vmatprep.subr.mxu0 0.0
    %109 = vmatpush1.xpose.msra.mxu0 0.0
    %110 = vmatprep.subr.mxu0 0.0
    %111 = vmatpush1.xpose.msra.mxu0 0.0
    %112 = vmatprep.subr.mxu0 0.0
    %113 = vmatpush1.xpose.msra.mxu0 0.0
    %114 = vmatprep.subr.mxu0 0.0
    %115 = vmatpush1.xpose.msra.mxu0 0.0
    %116 = vmatprep.mubr.f32.mxu0 0.0
    %117 = vmatmul.mubr.f32.gmra.mrb[0].mxu0 %v26
    %v118 = vpop.f32.mrb[0].mxu0
    %v119 = vadd.f32 0.0, %v118
    %v120 = vpop.f32.mrb[0].mxu0
    %121 = vdwg.mxu0
    %v122 = vmul.f32 %v119, 0.35355338
    %v123 = vld [vmem:[%s2] sm:$0x1]
    %v124 = vmul.f32 %v123, 2.0
    %v126 = vlaneseq
    %v127 = vshrl.u32 %v126, 7
    %v128 = vsub.s32 0, %v127
    %v129 = vrot.slane %v124, %v128
    %v131 = vadd.f32 %v122, %v129
    %vm132 = vcmp.ge.f32.partialorder %v131, 0.0
    %v133 = vmul.f32 %v131, 0.2
    %v134 = vsel %vm132, %v131, %v133
    %vm135 = vcmask 523264
    %136 = vst.msk [vmem:[#allocation2] sm:$0xff] %vm135, %v134
    // Predicated region
    $region14: #{tpu_custom_call.1} parent=1 // pred_check
      _
    $region15: #{tpu_custom_call.1} parent=1 // pred_check_branch
      %138 = sbr.rel (0) target = $region17
    $region16: #{tpu_custom_call.1} parent=1 // pred_region
      %s140 = ssub.s32 128, 128
      %141 = vsyncadd [#allocation3], %s140
      %s143 = sshll.u32 [#allocation2], 4
      %s144 = int_to_ptr.vmem [resolvable:$true] %s143
      %146 = dma.vmem_to_hbm [thread:$0]  %s144, 128, %s3, [#allocation3]
    $region17: #{tpu_custom_call.1} parent=1 // pred_fallthru
      _
    // Predicated region
    $region18: #{tpu_custom_call.1} parent=1 // pred_check
      _
    $region19: #{tpu_custom_call.1} parent=1 // pred_check_branch
      %148 = sbr.rel (0) target = $region21
    $region20: #{tpu_custom_call.1} parent=1 // pred_region
      %149 = dma.done [#allocation3], 128
    $region21: #{tpu_custom_call.1} parent=1 // pred_fallthru
      _
    %150 = vsyncpa [#allocation3], 1

</llo_original>
